<compile_context>
chip_gen: v6e
topology: v6e:2x2x1
jax: 0.10.0
libtpu: 0.0.40
codegen_flags: <defaults>
</compile_context>

<pallas_src>
import math

import jax
import jax.numpy as jnp
from jax.experimental import pallas as pl
from jax.experimental.pallas import tpu as pltpu

LEAKY_SLOPE = 0.01     # torch default for F.leaky_relu
BN_EPS = 1e-5          # torch default for BatchNorm2d
TAU = 0.2              # temperature used in forward()
_LANE = 128
_LOSS_LANE = 64        # lane of output row 0 that carries the scalar loss


def _align(n, m=_LANE):
    return ((n + m - 1) // m) * m


def _layout(N, T, H):
    """Static lane offsets, shared by pack_params and the kernel/wrapper."""
    NH, NT = N * H, N * T
    lo = dict(NH=NH, NT=NT)
    # per-call data blob (B*N rows): [x2d | u | x pair-row layout]
    lo["U_OFF"] = _align(T)
    lo["XR_OFF"] = _align(lo["U_OFF"] + N)
    lo["D_DATA"] = _align(lo["XR_OFF"] + NT)
    # K = T(=H) weights (T rows): [W_enc | tile(W1a) | tile(eye(H))]
    lo["W1A_OFF"] = _align(H)
    lo["RREP_OFF"] = _align(lo["W1A_OFF"] + NH)
    lo["D_WK16"] = _align(lo["RREP_OFF"] + NH)
    # K = N*T weights (NT rows): [kron(I,Wenc) | kron(I,W1b) | kron(I,W3a|W3b) | kron(I,Wbern)]
    lo["W1B_OFF"] = _align(NH)
    lo["W3_OFF"] = _align(lo["W1B_OFF"] + NH)
    lo["WBERN_OFF"] = _align(lo["W3_OFF"] + 2 * NH)
    lo["D_WK128"] = _align(lo["WBERN_OFF"] + N)
    # aux (max(N,8) rows): [kron(I,W2) | gamma | beta | bias rows]
    lo["GAMMA_OFF"] = _align(NH)
    lo["BETA_OFF"] = lo["GAMMA_OFF"] + 1
    lo["BIAS_OFF"] = _align(lo["BETA_OFF"] + 1)
    lo["D_AUX"] = _align(lo["BIAS_OFF"] + 2 * NH)
    lo["AUX_ROWS"] = max(N, 8)
    return lo


def glbern_vae_forward(x, u, packed):
    """Fused forward pass.  x: (B,N,T), u: (B,N,N) uniform noise in (0,1).

    Returns (adj (N,N), loss_recon scalar)."""
    B, N, T = x.shape
    H = T                       # module requires in_dim == 2*hidden_dim  =>  T == H
    lo = _layout(N, T, H)
    NH, NT = lo["NH"], lo["NT"]
    BN = B * N
    assert packed["wk128"].shape[0] == NT

    inv_tau = 1.0 / TAU
    inv_cnt = 1.0 / float(B * N * H)            # BatchNorm per-channel element count
    inv_b = 1.0 / float(B)
    inv_denom = 1.0 / float(B * N * N * 2 * H)  # MSE element count

    # ---- per-call data blob (single input DMA for all per-call data) --------
    # x in node layout, the uniform noise, and x broadcast to the pair-row
    # layout (so the j-indexed encoder output comes lane-dense off the MXU).
    x2d = x.reshape(BN, T)
    x_rep = jnp.broadcast_to(x.reshape(B, 1, NT), (B, N, NT)).reshape(BN, NT)
    u2d = u.reshape(BN, N)
    data = jnp.zeros((BN, lo["D_DATA"]), jnp.float32)
    data = (data.at[:, 0:T].set(x2d)
                .at[:, lo["U_OFF"]:lo["U_OFF"] + N].set(u2d)
                .at[:, lo["XR_OFF"]:lo["XR_OFF"] + NT].set(x_rep))

    def kernel(data_ref, wk16_ref, wk128_ref, aux_ref, out_ref):
        def leaky(v):
            return jnp.maximum(v, LEAKY_SLOPE * v)      # valid since 0 < slope < 1

        # ---- unpack (static, lane-aligned slices) ----------------------------
        x_nd = data_ref[:, 0:T]                                        # (BN, T)
        uu = data_ref[:, lo["U_OFF"]:lo["U_OFF"] + N]                  # (BN, N)
        x_pr = data_ref[:, lo["XR_OFF"]:lo["XR_OFF"] + NT]             # (BN, NT)

        w_enc = wk16_ref[:, 0:H]                                       # (T, H)
        w1a_rep = wk16_ref[:, lo["W1A_OFF"]:lo["W1A_OFF"] + NH]        # (T, NH)
        r_rep = wk16_ref[:, lo["RREP_OFF"]:lo["RREP_OFF"] + NH]        # (T, NH)

        wenc_bd = wk128_ref[:, 0:NH]                                   # (NT, NH)
        w1b_bd = wk128_ref[:, lo["W1B_OFF"]:lo["W1B_OFF"] + NH]        # (NT, NH)
        w3_bd = wk128_ref[:, lo["W3_OFF"]:lo["W3_OFF"] + 2 * NH]       # (NT, 2NH)
        wbern_bd = wk128_ref[:, lo["WBERN_OFF"]:lo["WBERN_OFF"] + N]   # (NT, N)

        w2_bd = aux_ref[0:N, 0:NH]                                     # (N, NH)
        gamma_c = aux_ref[0:N, lo["GAMMA_OFF"]:lo["GAMMA_OFF"] + 1]    # (N, 1)
        beta_c = aux_ref[0:N, lo["BETA_OFF"]:lo["BETA_OFF"] + 1]       # (N, 1)
        bo = lo["BIAS_OFF"]
        b_enc = aux_ref[0:1, bo:bo + H]                                # (1, H)
        b1_rep = aux_ref[1:2, bo:bo + NH]                              # (1, NH)
        benc_rep = aux_ref[2:3, bo:bo + NH]                            # (1, NH)
        b2_t = aux_ref[3:4, bo:bo + NH]                                # (1, NH)
        b3_t = aux_ref[4:5, bo:bo + 2 * NH]                            # (1, 2NH)
        b_bern = aux_ref[5:6, bo:bo + 1]                               # (1, 1)

        # ---- node encoder in both layouts, straight off the MXU --------------
        enc = leaky(jnp.dot(x_nd, w_enc, preferred_element_type=jnp.float32)
                    + b_enc)                                           # (BN, H): row (b,i) -> enc[b,i]
        enc_b = leaky(jnp.dot(x_pr, wenc_bd,
                              preferred_element_type=jnp.float32)
                      + benc_rep)                                      # (BN, NH): row (b,i), lane block j -> enc[b,j]

        # ---- fc1 on the pair tensor (replication folded into packed weights) -
        a_tile = jnp.dot(enc, w1a_rep,
                         preferred_element_type=jnp.float32) + b1_rep  # (BN, NH)
        b_tile = jnp.dot(enc_b, w1b_bd,
                         preferred_element_type=jnp.float32)           # (BN, NH)
        h = jnp.maximum(a_tile + b_tile, 0.0)                          # ReLU

        # ---- BatchNorm2d(N): channel = node i, two-pass (shifted) batch stats
        row_sum = jnp.sum(h, axis=1, keepdims=True)                    # (BN, 1)
        mean_c = jnp.sum(row_sum.reshape(B, N, 1), axis=0) * inv_cnt   # (N, 1)
        mean_r = jnp.broadcast_to(mean_c[None, :, :], (B, N, 1)).reshape(BN, 1)
        d = h - mean_r
        row_ss = jnp.sum(d * d, axis=1, keepdims=True)                 # (BN, 1)
        var_c = jnp.sum(row_ss.reshape(B, N, 1), axis=0) * inv_cnt     # biased
        scale_c = gamma_c * jax.lax.rsqrt(var_c + BN_EPS)              # (N, 1)
        scale_r = jnp.broadcast_to(scale_c[None, :, :], (B, N, 1)).reshape(BN, 1)
        beta_r = jnp.broadcast_to(beta_c[None, :, :], (B, N, 1)).reshape(BN, 1)
        h_bn = d * scale_r + beta_r                                    # (BN, NH)

        # ---- Bernoulli head + relaxed-Bernoulli sample (logit-direct) --------
        logit = jnp.dot(h_bn, wbern_bd,
                        preferred_element_type=jnp.float32) + b_bern   # (BN, N)
        # TODO(synk): BernSamplesGenerate is undefined in the source file; the
        # standard Gumbel-sigmoid / binary-concrete relaxation is used here.
        logit_u = jnp.log(uu * pl.reciprocal(1.0 - uu, approx=True))
        z = jax.nn.sigmoid((logit + logit_u) * inv_tau)                # (BN, N)

        # ---- decoder: fc2 (1->H) then fc3 (H->2H), block-diag lane-dense -----
        hdec = leaky(jnp.dot(z, w2_bd, preferred_element_type=jnp.float32)
                     + b2_t)                                           # (BN, NH)
        rec = jnp.dot(hdec, w3_bd,
                      preferred_element_type=jnp.float32) + b3_t       # (BN, 2NH)
        rec_a = rec[:, 0:NH]
        rec_b = rec[:, NH:2 * NH]

        # ---- MSE(recon_x, x_pair); x_pair halves reproduced via the MXU ------
        enc_a = jnp.dot(enc, r_rep, preferred_element_type=jnp.float32)  # (BN, NH)
        da = rec_a - enc_a
        db = rec_b - enc_b
        loss = jnp.sum(da * da + db * db) * inv_denom

        # ---- single lane-dense (N, 128) output slab ---------------------------
        adj = jnp.sum(z.reshape(B, N, N), axis=0) * inv_b              # (N, N)
        slab = jnp.concatenate(
            [adj, jnp.zeros((N, _LANE - N), jnp.float32)], axis=1)     # (N, 128)
        ri = jax.lax.broadcasted_iota(jnp.int32, (N, _LANE), 0)
        ci = jax.lax.broadcasted_iota(jnp.int32, (N, _LANE), 1)
        out_ref[...] = slab + jnp.where((ri == 0) & (ci == _LOSS_LANE), loss, 0.0)

    # Production-scale notes (not applied at this tiny size on purpose):
    #  * replace the kron(eye(N), W) block-diag expansions with a "parallel"
    #    grid over node-row blocks i (BatchNorm stats are per-i so they stay
    #    block-local) before N grows — kron is O(N^2 H^2) and would blow the
    #    v7x 64 MiB VMEM; the grid also unlocks the 2nd v7x TensorCore.
    #  * cast the K=128 matmul operands to bf16 (f32 accumulation) once the
    #    MXU actually becomes binding.
    #  * callers should batch more samples per pallas_call (B up to ~64) —
    #    the 16-row working set leaves this call overhead-bound.
    vmem = pl.BlockSpec(memory_space=pltpu.MemorySpace.VMEM)
    out = pl.pallas_call(
        kernel,
        out_shape=jax.ShapeDtypeStruct((N, _LANE), jnp.float32),
        in_specs=[vmem] * 4,
        out_specs=vmem,
    )(data, packed["wk16"], packed["wk128"], packed["aux"])
    return out[:, :N], out[0, _LOSS_LANE]


# ---------------------------------------------------------------------------
# Parameter construction (host side, done once; mirrors the torch module).
# Linear weights are stored (in_features, out_features) so the kernel can
# right-multiply.
# ---------------------------------------------------------------------------
def _xavier_uniform(key, fan_in, fan_out):
    bound = math.sqrt(6.0 / (fan_in + fan_out))
    return jax.random.uniform(key, (fan_in, fan_out), jnp.float32, -bound, bound)


def init_params(key, N, in_dim, hidden_dim=16, latent_dim=1):
    assert latent_dim == 1, "kernel is specialized for latent_dim=1"
    assert in_dim == 2 * hidden_dim, \
        "recon_loss(recon_x, x_pair) requires in_dim == 2*hidden_dim"
    T, H = in_dim // 2, hidden_dim
    ks = jax.random.split(key, 5)
    return dict(
        w_enc=_xavier_uniform(ks[0], T, H), b_enc=jnp.zeros((H,), jnp.float32),
        w1=_xavier_uniform(ks[1], 2 * H, H), b1=jnp.zeros((H,), jnp.float32),
        w_bern=_xavier_uniform(ks[2], H, 1), b_bern=jnp.zeros((1,), jnp.float32),
        gamma=jnp.ones((N,), jnp.float32), beta=jnp.zeros((N,), jnp.float32),
        w2=_xavier_uniform(ks[3], 1, H), b2=jnp.zeros((H,), jnp.float32),
        w3=_xavier_uniform(ks[4], H, in_dim), b3=jnp.zeros((in_dim,), jnp.float32),
    )


def pack_params(p, N):
    """Packs all parameters into 3 arrays with 128-aligned lane slots,
    block-diagonal / tiled expansions so every pair-tensor replication is a
    plain MXU matmul in the kernel."""
    T, H = p["w_enc"].shape
    assert T == H
    lo = _layout(N, T, H)
    NH, NT = lo["NH"], lo["NT"]
    f32 = jnp.float32
    eye_n = jnp.eye(N, dtype=f32)

    w1a, w1b = p["w1"][:H, :], p["w1"][H:, :]
    w3a, w3b = p["w3"][:, :H], p["w3"][:, H:]
    b3a, b3b = p["b3"][:H], p["b3"][H:]

    # K = T(=H) weights: node encoder, lane-replicated fc1 a-half, and the
    # lane-replication matrix kron(ones(1,N), eye(H)) used for the MSE target.
    wk16 = jnp.zeros((T, lo["D_WK16"]), f32)
    wk16 = (wk16.at[:, 0:H].set(p["w_enc"])
                 .at[:, lo["W1A_OFF"]:lo["W1A_OFF"] + NH].set(jnp.tile(w1a, (1, N)))
                 .at[:, lo["RREP_OFF"]:lo["RREP_OFF"] + NH].set(
                     jnp.tile(jnp.eye(H, dtype=f32), (1, N))))

    # K = N*T weights: block-diag encoder (pair-row layout), fc1 b-half,
    # fc3 (a|b halves fused) and the Bernoulli head.
    wk128 = jnp.zeros((NT, lo["D_WK128"]), f32)
    wk128 = (wk128
             .at[:, 0:NH].set(jnp.kron(eye_n, p["w_enc"]))
             .at[:, lo["W1B_OFF"]:lo["W1B_OFF"] + NH].set(jnp.kron(eye_n, w1b))
             .at[:, lo["W3_OFF"]:lo["W3_OFF"] + NH].set(jnp.kron(eye_n, w3a))
             .at[:, lo["W3_OFF"] + NH:lo["W3_OFF"] + 2 * NH].set(jnp.kron(eye_n, w3b))
             .at[:, lo["WBERN_OFF"]:lo["WBERN_OFF"] + N].set(
                 jnp.kron(eye_n, p["w_bern"])))

    # aux: block-diag fc2, BatchNorm affine columns, and all bias rows
    # (pre-tiled to the lane-dense layouts).
    bo = lo["BIAS_OFF"]
    aux = jnp.zeros((lo["AUX_ROWS"], lo["D_AUX"]), f32)
    aux = (aux
           .at[0:N, 0:NH].set(jnp.kron(eye_n, p["w2"]))
           .at[0:N, lo["GAMMA_OFF"]].set(p["gamma"])
           .at[0:N, lo["BETA_OFF"]].set(p["beta"])
           .at[0, bo:bo + H].set(p["b_enc"])
           .at[1, bo:bo + NH].set(jnp.tile(p["b1"], N))
           .at[2, bo:bo + NH].set(jnp.tile(p["b_enc"], N))
           .at[3, bo:bo + NH].set(jnp.tile(p["b2"], N))
           .at[4, bo:bo + 2 * NH].set(
               jnp.concatenate([jnp.tile(b3a, N), jnp.tile(b3b, N)]))
           .at[5, bo].set(p["b_bern"][0]))
    return dict(wk16=wk16, wk128=wk128, aux=aux)


if __name__ == "__main__":
    B, N, HIDDEN = 2, 8, 16
    IN_DIM = 2 * HIDDEN
    T = IN_DIM // 2

    root = jax.random.PRNGKey(0)
    k_x, k_u, k_p = jax.random.split(root, 3)

    x = jax.random.normal(k_x, (B, N, T), jnp.float32)
    # uniform noise for the relaxed-Bernoulli sample, clamped away from {0,1}
    u = jax.random.uniform(k_u, (B, N, N), jnp.float32,
                           minval=1e-6, maxval=1.0 - 1e-6)

    raw = init_params(k_p, N, IN_DIM, hidden_dim=HIDDEN, latent_dim=1)
    packed = pack_params(raw, N)          # host-side, once

    fwd = jax.jit(glbern_vae_forward)
    adj, loss_recon = fwd(x, u, packed)
    jax.block_until_ready((adj, loss_recon))

    assert adj.shape == (N, N)
    assert loss_recon.shape == ()
    assert bool(jnp.isfinite(loss_recon))
    assert bool(jnp.all(jnp.isfinite(adj)))
    print("KERNEL_OK")
</pallas_src>

<mosaic_0001>
module attributes {stable_mosaic.version = 11 : i64} {
  func.func @kernel(%arg0: memref<16x384xf32, #tpu.memory_space<vmem>>, %arg1: memref<16x384xf32, #tpu.memory_space<vmem>>, %arg2: memref<128x640xf32, #tpu.memory_space<vmem>>, %arg3: memref<8x512xf32, #tpu.memory_space<vmem>>, %arg4: memref<8x128xf32, #tpu.memory_space<vmem>>) attributes {dimension_semantics = [], scalar_prefetch = 0 : i64, scratch_operands = 0 : i64, tpu.core_type = #tpu.core_type<tc>} {
    %c0 = arith.constant 0 : index
    %c0_0 = arith.constant 0 : index
    %0 = vector.load %arg0[%c0, %c0_0] : memref<16x384xf32, #tpu.memory_space<vmem>>, vector<16x16xf32>
    %c0_1 = arith.constant 0 : index
    %c128 = arith.constant 128 : index
    %1 = vector.load %arg0[%c0_1, %c128] : memref<16x384xf32, #tpu.memory_space<vmem>>, vector<16x8xf32>
    %c0_2 = arith.constant 0 : index
    %c256 = arith.constant 256 : index
    %2 = vector.load %arg0[%c0_2, %c256] : memref<16x384xf32, #tpu.memory_space<vmem>>, vector<16x128xf32>
    %c0_3 = arith.constant 0 : index
    %c0_4 = arith.constant 0 : index
    %3 = vector.load %arg1[%c0_3, %c0_4] : memref<16x384xf32, #tpu.memory_space<vmem>>, vector<16x16xf32>
    %c0_5 = arith.constant 0 : index
    %c128_6 = arith.constant 128 : index
    %4 = vector.load %arg1[%c0_5, %c128_6] : memref<16x384xf32, #tpu.memory_space<vmem>>, vector<16x128xf32>
    %c0_7 = arith.constant 0 : index
    %c256_8 = arith.constant 256 : index
    %5 = vector.load %arg1[%c0_7, %c256_8] : memref<16x384xf32, #tpu.memory_space<vmem>>, vector<16x128xf32>
    %c0_9 = arith.constant 0 : index
    %c0_10 = arith.constant 0 : index
    %6 = vector.load %arg2[%c0_9, %c0_10] : memref<128x640xf32, #tpu.memory_space<vmem>>, vector<128x128xf32>
    %c0_11 = arith.constant 0 : index
    %c128_12 = arith.constant 128 : index
    %7 = vector.load %arg2[%c0_11, %c128_12] : memref<128x640xf32, #tpu.memory_space<vmem>>, vector<128x128xf32>
    %c0_13 = arith.constant 0 : index
    %c256_14 = arith.constant 256 : index
    %8 = vector.load %arg2[%c0_13, %c256_14] : memref<128x640xf32, #tpu.memory_space<vmem>>, vector<128x256xf32>
    %c0_15 = arith.constant 0 : index
    %c512 = arith.constant 512 : index
    %9 = vector.load %arg2[%c0_15, %c512] : memref<128x640xf32, #tpu.memory_space<vmem>>, vector<128x8xf32>
    %c0_16 = arith.constant 0 : index
    %c0_17 = arith.constant 0 : index
    %10 = vector.load %arg3[%c0_16, %c0_17] : memref<8x512xf32, #tpu.memory_space<vmem>>, vector<8x128xf32>
    %c0_18 = arith.constant 0 : index
    %c128_19 = arith.constant 128 : index
    %11 = vector.load %arg3[%c0_18, %c128_19] : memref<8x512xf32, #tpu.memory_space<vmem>>, vector<8x1xf32>
    %c0_20 = arith.constant 0 : index
    %c129 = arith.constant 129 : index
    %12 = vector.load %arg3[%c0_20, %c129] : memref<8x512xf32, #tpu.memory_space<vmem>>, vector<8x1xf32>
    %c0_21 = arith.constant 0 : index
    %c256_22 = arith.constant 256 : index
    %13 = vector.load %arg3[%c0_21, %c256_22] : memref<8x512xf32, #tpu.memory_space<vmem>>, vector<1x16xf32>
    %c1 = arith.constant 1 : index
    %c256_23 = arith.constant 256 : index
    %14 = vector.load %arg3[%c1, %c256_23] : memref<8x512xf32, #tpu.memory_space<vmem>>, vector<1x128xf32>
    %c2 = arith.constant 2 : index
    %c256_24 = arith.constant 256 : index
    %15 = vector.load %arg3[%c2, %c256_24] : memref<8x512xf32, #tpu.memory_space<vmem>>, vector<1x128xf32>
    %c3 = arith.constant 3 : index
    %c256_25 = arith.constant 256 : index
    %16 = vector.load %arg3[%c3, %c256_25] : memref<8x512xf32, #tpu.memory_space<vmem>>, vector<1x128xf32>
    %c4 = arith.constant 4 : index
    %c256_26 = arith.constant 256 : index
    %17 = vector.load %arg3[%c4, %c256_26] : memref<8x512xf32, #tpu.memory_space<vmem>>, vector<1x256xf32>
    %c5 = arith.constant 5 : index
    %c256_27 = arith.constant 256 : index
    %18 = vector.load %arg3[%c5, %c256_27] : memref<8x512xf32, #tpu.memory_space<vmem>>, vector<1x1xf32>
    %cst = arith.constant dense<0.000000e+00> : vector<16x16xf32>
    %19 = tpu.matmul %0, %3, %cst {dimension_numbers = #tpu.dot_dimension_numbers<[1], [0], [0], [1], [0, 0, 1, 1], [], []>} : vector<16x16xf32>, vector<16x16xf32>, vector<16x16xf32> -> vector<16x16xf32>
    %20 = vector.broadcast %13 : vector<1x16xf32> to vector<16x16xf32>
    %21 = arith.addf %19, %20 : vector<16x16xf32>
    %cst_28 = arith.constant 0.00999999977 : f32
    %22 = vector.broadcast %cst_28 : f32 to vector<16x16xf32>
    %23 = arith.mulf %22, %21 : vector<16x16xf32>
    %24 = arith.maximumf %21, %23 : vector<16x16xf32>
    %cst_29 = arith.constant dense<0.000000e+00> : vector<16x128xf32>
    %25 = tpu.matmul %2, %6, %cst_29 {dimension_numbers = #tpu.dot_dimension_numbers<[1], [0], [0], [1], [0, 0, 1, 1], [], []>} : vector<16x128xf32>, vector<128x128xf32>, vector<16x128xf32> -> vector<16x128xf32>
    %26 = vector.broadcast %15 : vector<1x128xf32> to vector<16x128xf32>
    %27 = arith.addf %25, %26 : vector<16x128xf32>
    %cst_30 = arith.constant 0.00999999977 : f32
    %28 = vector.broadcast %cst_30 : f32 to vector<16x128xf32>
    %29 = arith.mulf %28, %27 : vector<16x128xf32>
    %30 = arith.maximumf %27, %29 : vector<16x128xf32>
    %cst_31 = arith.constant dense<0.000000e+00> : vector<16x128xf32>
    %31 = tpu.matmul %24, %4, %cst_31 {dimension_numbers = #tpu.dot_dimension_numbers<[1], [0], [0], [1], [0, 0, 1, 1], [], []>} : vector<16x16xf32>, vector<16x128xf32>, vector<16x128xf32> -> vector<16x128xf32>
    %32 = vector.broadcast %14 : vector<1x128xf32> to vector<16x128xf32>
    %33 = arith.addf %31, %32 : vector<16x128xf32>
    %cst_32 = arith.constant dense<0.000000e+00> : vector<16x128xf32>
    %34 = tpu.matmul %30, %7, %cst_32 {dimension_numbers = #tpu.dot_dimension_numbers<[1], [0], [0], [1], [0, 0, 1, 1], [], []>} : vector<16x128xf32>, vector<128x128xf32>, vector<16x128xf32> -> vector<16x128xf32>
    %35 = arith.addf %33, %34 : vector<16x128xf32>
    %cst_33 = arith.constant 0.000000e+00 : f32
    %36 = vector.broadcast %cst_33 : f32 to vector<16x128xf32>
    %37 = arith.maximumf %35, %36 : vector<16x128xf32>
    %cst_34 = arith.constant dense<0.000000e+00> : vector<16xf32>
    %38 = vector.multi_reduction <add>, %37, %cst_34 [1] : vector<16x128xf32> to vector<16xf32>
    %39 = vector.shape_cast %38 : vector<16xf32> to vector<16x1xf32>
    %40 = vector.shape_cast %39 : vector<16x1xf32> to vector<2x8x1xf32>
    %cst_35 = arith.constant dense<0.000000e+00> : vector<8x1xf32>
    %41 = vector.multi_reduction <add>, %40, %cst_35 [0] : vector<2x8x1xf32> to vector<8x1xf32>
    %cst_36 = arith.constant 3.906250e-03 : f32
    %42 = vector.broadcast %cst_36 : f32 to vector<8x1xf32>
    %43 = arith.mulf %41, %42 : vector<8x1xf32>
    %44 = vector.shape_cast %43 : vector<8x1xf32> to vector<1x8x1xf32>
    %45 = vector.shape_cast %44 : vector<1x8x1xf32> to vector<1x8x1xf32>
    %46 = vector.broadcast %45 : vector<1x8x1xf32> to vector<2x8x1xf32>
    %47 = vector.shape_cast %46 : vector<2x8x1xf32> to vector<16x1xf32>
    %48 = vector.broadcast %47 : vector<16x1xf32> to vector<16x128xf32>
    %49 = arith.subf %37, %48 : vector<16x128xf32>
    %50 = arith.mulf %49, %49 : vector<16x128xf32>
    %cst_37 = arith.constant dense<0.000000e+00> : vector<16xf32>
    %51 = vector.multi_reduction <add>, %50, %cst_37 [1] : vector<16x128xf32> to vector<16xf32>
    %52 = vector.shape_cast %51 : vector<16xf32> to vector<16x1xf32>
    %53 = vector.shape_cast %52 : vector<16x1xf32> to vector<2x8x1xf32>
    %cst_38 = arith.constant dense<0.000000e+00> : vector<8x1xf32>
    %54 = vector.multi_reduction <add>, %53, %cst_38 [0] : vector<2x8x1xf32> to vector<8x1xf32>
    %cst_39 = arith.constant 3.906250e-03 : f32
    %55 = vector.broadcast %cst_39 : f32 to vector<8x1xf32>
    %56 = arith.mulf %54, %55 : vector<8x1xf32>
    %cst_40 = arith.constant 9.99999974E-6 : f32
    %57 = vector.broadcast %cst_40 : f32 to vector<8x1xf32>
    %58 = arith.addf %56, %57 : vector<8x1xf32>
    %59 = math.rsqrt %58 : vector<8x1xf32>
    %60 = arith.mulf %11, %59 : vector<8x1xf32>
    %61 = vector.shape_cast %60 : vector<8x1xf32> to vector<1x8x1xf32>
    %62 = vector.shape_cast %61 : vector<1x8x1xf32> to vector<1x8x1xf32>
    %63 = vector.broadcast %62 : vector<1x8x1xf32> to vector<2x8x1xf32>
    %64 = vector.shape_cast %63 : vector<2x8x1xf32> to vector<16x1xf32>
    %65 = vector.shape_cast %12 : vector<8x1xf32> to vector<1x8x1xf32>
    %66 = vector.shape_cast %65 : vector<1x8x1xf32> to vector<1x8x1xf32>
    %67 = vector.broadcast %66 : vector<1x8x1xf32> to vector<2x8x1xf32>
    %68 = vector.shape_cast %67 : vector<2x8x1xf32> to vector<16x1xf32>
    %69 = vector.broadcast %64 : vector<16x1xf32> to vector<16x128xf32>
    %70 = arith.mulf %49, %69 : vector<16x128xf32>
    %71 = vector.broadcast %68 : vector<16x1xf32> to vector<16x128xf32>
    %72 = arith.addf %70, %71 : vector<16x128xf32>
    %cst_41 = arith.constant dense<0.000000e+00> : vector<16x8xf32>
    %73 = tpu.matmul %72, %9, %cst_41 {dimension_numbers = #tpu.dot_dimension_numbers<[1], [0], [0], [1], [0, 0, 1, 1], [], []>} : vector<16x128xf32>, vector<128x8xf32>, vector<16x8xf32> -> vector<16x8xf32>
    %74 = vector.broadcast %18 : vector<1x1xf32> to vector<16x8xf32>
    %75 = arith.addf %73, %74 : vector<16x8xf32>
    %cst_42 = arith.constant 1.000000e+00 : f32
    %76 = vector.broadcast %cst_42 : f32 to vector<16x8xf32>
    %77 = arith.subf %76, %1 : vector<16x8xf32>
    %78 = tpu.reciprocal %77 {approx = true} : vector<16x8xf32> -> vector<16x8xf32>
    %79 = arith.mulf %1, %78 : vector<16x8xf32>
    %80 = math.log %79 : vector<16x8xf32>
    %81 = arith.addf %75, %80 : vector<16x8xf32>
    %cst_43 = arith.constant 5.000000e+00 : f32
    %82 = vector.broadcast %cst_43 : f32 to vector<16x8xf32>
    %83 = arith.mulf %81, %82 : vector<16x8xf32>
    %84 = arith.negf %83 : vector<16x8xf32>
    %85 = math.exp %84 : vector<16x8xf32>
    %cst_44 = arith.constant 1.000000e+00 : f32
    %86 = vector.broadcast %cst_44 : f32 to vector<16x8xf32>
    %87 = arith.addf %86, %85 : vector<16x8xf32>
    %88 = arith.divf %86, %87 : vector<16x8xf32>
    %cst_45 = arith.constant dense<0.000000e+00> : vector<16x128xf32>
    %89 = tpu.matmul %88, %10, %cst_45 {dimension_numbers = #tpu.dot_dimension_numbers<[1], [0], [0], [1], [0, 0, 1, 1], [], []>} : vector<16x8xf32>, vector<8x128xf32>, vector<16x128xf32> -> vector<16x128xf32>
    %90 = vector.broadcast %16 : vector<1x128xf32> to vector<16x128xf32>
    %91 = arith.addf %89, %90 : vector<16x128xf32>
    %cst_46 = arith.constant 0.00999999977 : f32
    %92 = vector.broadcast %cst_46 : f32 to vector<16x128xf32>
    %93 = arith.mulf %92, %91 : vector<16x128xf32>
    %94 = arith.maximumf %91, %93 : vector<16x128xf32>
    %cst_47 = arith.constant dense<0.000000e+00> : vector<16x256xf32>
    %95 = tpu.matmul %94, %8, %cst_47 {dimension_numbers = #tpu.dot_dimension_numbers<[1], [0], [0], [1], [0, 0, 1, 1], [], []>} : vector<16x128xf32>, vector<128x256xf32>, vector<16x256xf32> -> vector<16x256xf32>
    %96 = vector.broadcast %17 : vector<1x256xf32> to vector<16x256xf32>
    %97 = arith.addf %95, %96 : vector<16x256xf32>
    %98 = vector.extract_strided_slice %97 {offsets = [0, 0], sizes = [16, 128], strides = [1, 1]} : vector<16x256xf32> to vector<16x128xf32>
    %99 = vector.extract_strided_slice %97 {offsets = [0, 128], sizes = [16, 128], strides = [1, 1]} : vector<16x256xf32> to vector<16x128xf32>
    %cst_48 = arith.constant dense<0.000000e+00> : vector<16x128xf32>
    %100 = tpu.matmul %24, %5, %cst_48 {dimension_numbers = #tpu.dot_dimension_numbers<[1], [0], [0], [1], [0, 0, 1, 1], [], []>} : vector<16x16xf32>, vector<16x128xf32>, vector<16x128xf32> -> vector<16x128xf32>
    %101 = arith.subf %98, %100 : vector<16x128xf32>
    %102 = arith.subf %99, %30 : vector<16x128xf32>
    %103 = arith.mulf %101, %101 : vector<16x128xf32>
    %104 = arith.mulf %102, %102 : vector<16x128xf32>
    %105 = arith.addf %103, %104 : vector<16x128xf32>
    %106 = vector.shape_cast %105 : vector<16x128xf32> to vector<1x16x128xf32>
    %cst_49 = arith.constant dense<0.000000e+00> : vector<1xf32>
    %107 = vector.multi_reduction <add>, %106, %cst_49 [1, 2] : vector<1x16x128xf32> to vector<1xf32>
    %108 = vector.shape_cast %107 : vector<1xf32> to vector<1x1x1xf32>
    %109 = vector.extract %108[0, 0, 0] : f32 from vector<1x1x1xf32>
    %cst_50 = arith.constant 2.44140625E-4 : f32
    %110 = arith.mulf %109, %cst_50 : f32
    %111 = vector.shape_cast %88 : vector<16x8xf32> to vector<2x8x8xf32>
    %cst_51 = arith.constant dense<0.000000e+00> : vector<8x8xf32>
    %112 = vector.multi_reduction <add>, %111, %cst_51 [0] : vector<2x8x8xf32> to vector<8x8xf32>
    %cst_52 = arith.constant 5.000000e-01 : f32
    %113 = vector.broadcast %cst_52 : f32 to vector<8x8xf32>
    %114 = arith.mulf %112, %113 : vector<8x8xf32>
    %cst_53 = arith.constant 0.000000e+00 : f32
    %115 = vector.broadcast %cst_53 : f32 to vector<8x120xf32>
    %116 = tpu.concatenate %114, %115 in 1 : vector<8x8xf32>, vector<8x120xf32> -> vector<8x128xf32>
    %117 = tpu.iota {dimensions = array<i32: 0>} : vector<8x128xi32>
    %118 = tpu.iota {dimensions = array<i32: 1>} : vector<8x128xi32>
    %c0_i32 = arith.constant 0 : i32
    %119 = vector.broadcast %c0_i32 : i32 to vector<8x128xi32>
    %120 = arith.cmpi eq, %117, %119 : vector<8x128xi32>
    %c64_i32 = arith.constant 64 : i32
    %121 = vector.broadcast %c64_i32 : i32 to vector<8x128xi32>
    %122 = arith.cmpi eq, %118, %121 : vector<8x128xi32>
    %123 = arith.andi %120, %122 : vector<8x128xi1>
    %cst_54 = arith.constant 0.000000e+00 : f32
    %124 = vector.broadcast %110 : f32 to vector<8x128xf32>
    %125 = vector.broadcast %cst_54 : f32 to vector<8x128xf32>
    %126 = arith.select %123, %124, %125 : vector<8x128xi1>, vector<8x128xf32>
    %127 = arith.addf %116, %126 : vector<8x128xf32>
    %c0_55 = arith.constant 0 : index
    %c0_56 = arith.constant 0 : index
    %128 = vector.load %arg4[%c0_55, %c0_56] : memref<8x128xf32, #tpu.memory_space<vmem>>, vector<8x128xf32>
    tpu.vector_store %arg4[%c0_55, %c0_56], %127 {strides = array<i32>} : memref<8x128xf32, #tpu.memory_space<vmem>>, vector<8x128xf32>,
    return
  }
}

</mosaic_0001>

<llo_original>
// kernel: glbern_vae_forward.1
$region0: #{glbern_vae_forward.1}
  #allocation0 [shape = 'u32[]', space=smem, size = 0x4, offset = 0x4, fixed_abs, tag = 'smem constant byte address 0x4 - core index']
  #allocation1 [shape = 'u32[144,128]{1,0:T(1,128)}', space=vmem, size = 0x12000, scoped, tag = 'internal scratch']
  %s0 = inlined_call_operand.vmem [shape: f32[16,384], index: 0, kind: input, shape index: {}]
  %s1 = inlined_call_operand.vmem [shape: f32[16,384], index: 1, kind: input, shape index: {}]
  %s2 = inlined_call_operand.hbm [shape: f32[128,640], index: 2, kind: input, shape index: {}]
  %s3 = inlined_call_operand.vmem [shape: f32[8,512], index: 3, kind: input, shape index: {}]
  %s4 = inlined_call_operand.vmem [shape: f32[8,128], index: 4, kind: output, shape index: {}]
  %s5 = sld [smem:[#allocation0]]
  $region30: #{glbern_vae_forward.1} parent=0
    _
  %s7 = ssub.s32 1, %s5
  %s8 = scalar_select 0, %s7, %s5
  $region1: #{glbern_vae_forward.1} parent=0
    #allocation2 [shape = 'u8[327680]{0}', space=vmem, size = 0x50000, scoped, tag = 'input window, operand 2, single buffered']
    #allocation3 [shape = 's32[1]{0}', space=sflag, size = 0x4, scoped, tag = 'scoped memory for glbern_vae_forward.1']
    %9 = vsyncpa [#allocation3], 0
    // Predicated region
    $region2: #{glbern_vae_forward.1} parent=1 // pred_check
      _
    $region3: #{glbern_vae_forward.1} parent=1 // pred_check_branch
      %11 = sbr.rel (0) target = $region5
    $region4: #{glbern_vae_forward.1} parent=1 // pred_region
      _
    $region5: #{glbern_vae_forward.1} parent=1 // pred_fallthru
      _
    // Predicated region
    $region6: #{glbern_vae_forward.1} parent=1 // pred_check
      _
    $region7: #{glbern_vae_forward.1} parent=1 // pred_check_branch
      %13 = sbr.rel (0) target = $region9
    $region8: #{glbern_vae_forward.1} parent=1 // pred_region
      _
    $region9: #{glbern_vae_forward.1} parent=1 // pred_fallthru
      _
    // Predicated region
    $region10: #{glbern_vae_forward.1} parent=1 // pred_check
      _
    $region11: #{glbern_vae_forward.1} parent=1 // pred_check_branch
      %15 = sbr.rel (0) target = $region13
    $region12: #{glbern_vae_forward.1} parent=1 // pred_region
      %s17 = ssub.s32 10240, 10240
      %18 = vsyncadd [#allocation3], %s17
      %s19 = sshll.u32 [#allocation2], 4
      %s20 = int_to_ptr.vmem [resolvable:$true] %s19
      %25 = dma.hbm_to_vmem [thread:$0]  %s2, 10240, %s20, [#allocation3], 640, 640, 40
    $region13: #{glbern_vae_forward.1} parent=1 // pred_fallthru
      _
    // Predicated region
    $region14: #{glbern_vae_forward.1} parent=1 // pred_check
      _
    $region15: #{glbern_vae_forward.1} parent=1 // pred_check_branch
      %27 = sbr.rel (0) target = $region17
    $region16: #{glbern_vae_forward.1} parent=1 // pred_region
      _
    $region17: #{glbern_vae_forward.1} parent=1 // pred_fallthru
      _
    // Predicated region
    $region18: #{glbern_vae_forward.1} parent=1 // pred_check
      _
    $region19: #{glbern_vae_forward.1} parent=1 // pred_check_branch
      %29 = sbr.rel (0) target = $region21
    $region20: #{glbern_vae_forward.1} parent=1 // pred_region
      %30 = dma.done [#allocation3], 10240
    $region21: #{glbern_vae_forward.1} parent=1 // pred_fallthru
      _
    %v31 = vld [vmem:[%s0] sm:$0xff]
    %v32 = vld [vmem:[%s0 + $0x18] sm:$0xff]
    %v33 = vld [vmem:[%s0 + $0x8] sm:$0xff]
    %v34 = vld [vmem:[%s0 + $0x20] sm:$0xff]
    %v35 = vld [vmem:[%s0 + $0x10] sm:$0xff]
    %v36 = vld [vmem:[%s0 + $0x28] sm:$0xff]
    %v37 = vld [vmem:[%s1] sm:$0xff]
    %v38 = vld [vmem:[%s1 + $0x18] sm:$0xff]
    %v39 = vld [vmem:[%s1 + $0x8] sm:$0xff]
    %v40 = vld [vmem:[%s1 + $0x20] sm:$0xff]
    %v41 = vld [vmem:[%s1 + $0x10] sm:$0xff]
    %v42 = vld [vmem:[%s1 + $0x28] sm:$0xff]
    %v43 = vld [vmem:[#allocation2] sm:$0xff]
    %v44 = vld [vmem:[#allocation2 + $0x28] sm:$0xff]
    %v45 = vld [vmem:[#allocation2 + $0x50] sm:$0xff]
    %v46 = vld [vmem:[#allocation2 + $0x78] sm:$0xff]
    %v47 = vld [vmem:[#allocation2 + $0xa0] sm:$0xff]
    %v48 = vld [vmem:[#allocation2 + $0xc8] sm:$0xff]
    %v49 = vld [vmem:[#allocation2 + $0xf0] sm:$0xff]
    %v50 = vld [vmem:[#allocation2 + $0x118] sm:$0xff]
    %v51 = vld [vmem:[#allocation2 + $0x140] sm:$0xff]
    %v52 = vld [vmem:[#allocation2 + $0x168] sm:$0xff]
    %v53 = vld [vmem:[#allocation2 + $0x190] sm:$0xff]
    %v54 = vld [vmem:[#allocation2 + $0x1b8] sm:$0xff]
    %v55 = vld [vmem:[#allocation2 + $0x1e0] sm:$0xff]
    %v56 = vld [vmem:[#allocation2 + $0x208] sm:$0xff]
    %v57 = vld [vmem:[#allocation2 + $0x230] sm:$0xff]
    %v58 = vld [vmem:[#allocation2 + $0x258] sm:$0xff]
    %v59 = vld [vmem:[#allocation2 + $0x8] sm:$0xff]
    %v60 = vld [vmem:[#allocation2 + $0x30] sm:$0xff]
    %v61 = vld [vmem:[#allocation2 + $0x58] sm:$0xff]
    %v62 = vld [vmem:[#allocation2 + $0x80] sm:$0xff]
    %v63 = vld [vmem:[#allocation2 + $0xa8] sm:$0xff]
    %v64 = vld [vmem:[#allocation2 + $0xd0] sm:$0xff]
    %v65 = vld [vmem:[#allocation2 + $0xf8] sm:$0xff]
    %v66 = vld [vmem:[#allocation2 + $0x120] sm:$0xff]
    %v67 = vld [vmem:[#allocation2 + $0x148] sm:$0xff]
    %v68 = vld [vmem:[#allocation2 + $0x170] sm:$0xff]
    %v69 = vld [vmem:[#allocation2 + $0x198] sm:$0xff]
    %v70 = vld [vmem:[#allocation2 + $0x1c0] sm:$0xff]
    %v71 = vld [vmem:[#allocation2 + $0x1e8] sm:$0xff]
    %v72 = vld [vmem:[#allocation2 + $0x210] sm:$0xff]
    %v73 = vld [vmem:[#allocation2 + $0x238] sm:$0xff]
    %v74 = vld [vmem:[#allocation2 + $0x260] sm:$0xff]
    %v75 = vld [vmem:[#allocation2 + $0x10] sm:$0xff]
    %v76 = vld [vmem:[#allocation2 + $0x18] sm:$0xff]
    %v77 = vld [vmem:[#allocation2 + $0x38] sm:$0xff]
    %v78 = vld [vmem:[#allocation2 + $0x40] sm:$0xff]
    %v79 = vld [vmem:[#allocation2 + $0x60] sm:$0xff]
    %v80 = vld [vmem:[#allocation2 + $0x68] sm:$0xff]
    %v81 = vld [vmem:[#allocation2 + $0x88] sm:$0xff]
    %v82 = vld [vmem:[#allocation2 + $0x90] sm:$0xff]
    %v83 = vld [vmem:[#allocation2 + $0xb0] sm:$0xff]
    %v84 = vld [vmem:[#allocation2 + $0xb8] sm:$0xff]
    %v85 = vld [vmem:[#allocation2 + $0xd8] sm:$0xff]
    %v86 = vld [vmem:[#allocation2 + $0xe0] sm:$0xff]
    %v87 = vld [vmem:[#allocation2 + $0x100] sm:$0xff]
    %v88 = vld [vmem:[#allocation2 + $0x108] sm:$0xff]
    %v89 = vld [vmem:[#allocation2 + $0x128] sm:$0xff]
    %v90 = vld [vmem:[#allocation2 + $0x130] sm:$0xff]
    %v91 = vld [vmem:[#allocation2 + $0x150] sm:$0xff]
    %v92 = vld [vmem:[#allocation2 + $0x158] sm:$0xff]
    %v93 = vld [vmem:[#allocation2 + $0x178] sm:$0xff]
    %v94 = vld [vmem:[#allocation2 + $0x180] sm:$0xff]
    %v95 = vld [vmem:[#allocation2 + $0x1a0] sm:$0xff]
    %v96 = vld [vmem:[#allocation2 + $0x1a8] sm:$0xff]
    %v97 = vld [vmem:[#allocation2 + $0x1c8] sm:$0xff]
    %v98 = vld [vmem:[#allocation2 + $0x1d0] sm:$0xff]
    %v99 = vld [vmem:[#allocation2 + $0x1f0] sm:$0xff]
    %v100 = vld [vmem:[#allocation2 + $0x1f8] sm:$0xff]
    %v101 = vld [vmem:[#allocation2 + $0x218] sm:$0xff]
    %v102 = vld [vmem:[#allocation2 + $0x220] sm:$0xff]
    %v103 = vld [vmem:[#allocation2 + $0x240] sm:$0xff]
    %v104 = vld [vmem:[#allocation2 + $0x248] sm:$0xff]
    %v105 = vld [vmem:[#allocation2 + $0x268] sm:$0xff]
    %v106 = vld [vmem:[#allocation2 + $0x270] sm:$0xff]
    %v107 = vld [vmem:[#allocation2 + $0x20] sm:$0xff]
    %v108 = vld [vmem:[#allocation2 + $0x48] sm:$0xff]
    %v109 = vld [vmem:[#allocation2 + $0x70] sm:$0xff]
    %v110 = vld [vmem:[#allocation2 + $0x98] sm:$0xff]
    %v111 = vld [vmem:[#allocation2 + $0xc0] sm:$0xff]
    %v112 = vld [vmem:[#allocation2 + $0xe8] sm:$0xff]
    %v113 = vld [vmem:[#allocation2 + $0x110] sm:$0xff]
    %v114 = vld [vmem:[#allocation2 + $0x138] sm:$0xff]
    %v115 = vld [vmem:[#allocation2 + $0x160] sm:$0xff]
    %v116 = vld [vmem:[#allocation2 + $0x188] sm:$0xff]
    %v117 = vld [vmem:[#allocation2 + $0x1b0] sm:$0xff]
    %v118 = vld [vmem:[#allocation2 + $0x1d8] sm:$0xff]
    %v119 = vld [vmem:[#allocation2 + $0x200] sm:$0xff]
    %v120 = vld [vmem:[#allocation2 + $0x228] sm:$0xff]
    %v121 = vld [vmem:[#allocation2 + $0x250] sm:$0xff]
    %v122 = vld [vmem:[#allocation2 + $0x278] sm:$0xff]
    %v123 = vld [vmem:[%s3] sm:$0xff]
    %v124 = vld [vmem:[%s3 + $0x8] sm:$0xff]
    %v125 = vld [vmem:[%s3 + $0x10] ss:$0 sm:$0xff]
    %v126 = vld [vmem:[%s3 + $0x11] ss:$0 sm:$0xff]
    %v127 = vld [vmem:[%s3 + $0x12] ss:$0 sm:$0xff]
    %v128 = vld [vmem:[%s3 + $0x13] ss:$0 sm:$0xff]
    %s129 = scalar_lea.vmem %s3, 20
    %v130 = vld [vmem:[%s129] ss:$8 sm:$0x3]
    %v131 = vld [vmem:[%s3 + $0x15] ss:$0 sm:$0xff]
    %vm132 = vcmask 130048
    %v134 = vsel %vm132, %v31, 0
    %v137 = vsel %vm132, %v32, 0
    %139 = vmatprep.subr.mxu0 0.0
    %140 = vmatpush1.msra.mxu0 0.0
    %141 = vmatprep.subr.mxu0 0.0
    %142 = vmatpush1.msra.mxu0 0.0
    %143 = vmatprep.subr.mxu0 0.0
    %144 = vmatpush1.msra.mxu0 0.0
    %145 = vmatprep.subr.mxu0 0.0
    %146 = vmatpush1.msra.mxu0 0.0
    %147 = vmatprep.subr.mxu0 0.0
    %148 = vmatpush1.msra.mxu0 0.0
    %149 = vmatprep.subr.mxu0 0.0
    %150 = vmatpush1.msra.mxu0 0.0
    %151 = vmatprep.subr.mxu0 0.0
    %152 = vmatpush1.msra.mxu0 0.0
    %153 = vmatprep.subr.mxu0 0.0
    %154 = vmatpush1.msra.mxu0 0.0
    %155 = vmatprep.subr.mxu0 0.0
    %156 = vmatpush1.msra.mxu0 0.0
    %157 = vmatprep.subr.mxu0 0.0
    %158 = vmatpush1.msra.mxu0 0.0
    %159 = vmatprep.subr.mxu0 0.0
    %160 = vmatpush1.msra.mxu0 0.0
    %161 = vmatprep.subr.mxu0 0.0
    %162 = vmatpush1.msra.mxu0 0.0
    %163 = vmatprep.subr.mxu0 0.0
    %164 = vmatpush1.msra.mxu0 0.0
    %165 = vmatprep.subr.mxu0 0.0
    %166 = vmatpush1.msra.mxu0 0.0
    %167 = vmatprep.subr.mxu0 0.0
    %168 = vmatpush1.msra.mxu0 %v38
    %169 = vmatprep.subr.mxu0 0.0
    %170 = vmatpush1.msra.mxu0 %v37
    %171 = vmatprep.subr.mxu0 0.0
    %172 = vmatpush2.msra.mxu0 0.0
    %173 = vmatprep.subr.mxu0 0.0
    %174 = vmatpush2.msra.mxu0 0.0
    %175 = vmatprep.subr.mxu0 0.0
    %176 = vmatpush2.msra.mxu0 0.0
    %177 = vmatprep.subr.mxu0 0.0
    %178 = vmatpush2.msra.mxu0 0.0
    %179 = vmatprep.subr.mxu0 0.0
    %180 = vmatpush2.msra.mxu0 0.0
    %181 = vmatprep.subr.mxu0 0.0
    %182 = vmatpush2.msra.mxu0 0.0
    %183 = vmatprep.subr.mxu0 0.0
    %184 = vmatpush2.msra.mxu0 0.0
    %185 = vmatprep.subr.mxu0 0.0
    %186 = vmatpush2.msra.mxu0 0.0
    %187 = vmatprep.subr.mxu0 0.0
    %188 = vmatpush2.msra.mxu0 0.0
    %189 = vmatprep.subr.mxu0 0.0
    %190 = vmatpush2.msra.mxu0 0.0
    %191 = vmatprep.subr.mxu0 0.0
    %192 = vmatpush2.msra.mxu0 0.0
    %193 = vmatprep.subr.mxu0 0.0
    %194 = vmatpush2.msra.mxu0 0.0
    %195 = vmatprep.subr.mxu0 0.0
    %196 = vmatpush2.msra.mxu0 0.0
    %197 = vmatprep.subr.mxu0 0.0
    %198 = vmatpush2.msra.mxu0 0.0
    %199 = vmatprep.subr.mxu0 0.0
    %200 = vmatpush2.msra.mxu0 0.0
    %201 = vmatprep.subr.mxu0 0.0
    %202 = vmatpush2.msra.mxu0 0.0
    %203 = vmatprep.mubr.f32.mxu0 0.0
    %204 = vmatmul.mubr.f32.gmra.mxu0 %v134
    %v205 = vpop.f32.mrf.mxu0
    %v206 = vadd.f32 %v125, %v205
    %v207 = vpop.f32.mrf.mxu0
    %208 = vmatprep.mubr.f32.mxu0 0.0
    %209 = vmatmul.mubr.f32.gmra.mxu0 %v137
    %v210 = vpop.f32.mrf.mxu0
    %v211 = vadd.f32 %v125, %v210
    %v212 = vpop.f32.mrf.mxu0
    %213 = vdwg.mxu0
    %v214 = vmul.f32 %v206, 0.01
    %v215 = vmul.f32 %v211, 0.01
    %v216 = vmax.f32 %v206, %v214
    %v217 = vmax.f32 %v211, %v215
    %218 = vmatprep.subr.mxu0 0.0
    %219 = vmatpush1.msra.mxu0 %v58
    %220 = vmatprep.subr.mxu0 0.0
    %221 = vmatpush1.msra.mxu0 %v57
    %222 = vmatprep.subr.mxu0 0.0
    %223 = vmatpush1.msra.mxu0 %v56
    %224 = vmatprep.subr.mxu0 0.0
    %225 = vmatpush1.msra.mxu0 %v55
    %226 = vmatprep.subr.mxu0 0.0
    %227 = vmatpush1.msra.mxu0 %v54
    %228 = vmatprep.subr.mxu0 0.0
    %229 = vmatpush1.msra.mxu0 %v53
    %230 = vmatprep.subr.mxu0 0.0
    %231 = vmatpush1.msra.mxu0 %v52
    %232 = vmatprep.subr.mxu0 0.0
    %233 = vmatpush1.msra.mxu0 %v51
    %234 = vmatprep.subr.mxu0 0.0
    %235 = vmatpush1.msra.mxu0 %v50
    %236 = vmatprep.subr.mxu0 0.0
    %237 = vmatpush1.msra.mxu0 %v49
    %238 = vmatprep.subr.mxu0 0.0
    %239 = vmatpush1.msra.mxu0 %v48
    %240 = vmatprep.subr.mxu0 0.0
    %241 = vmatpush1.msra.mxu0 %v47
    %242 = vmatprep.subr.mxu0 0.0
    %243 = vmatpush1.msra.mxu0 %v46
    %244 = vmatprep.subr.mxu0 0.0
    %245 = vmatpush1.msra.mxu0 %v45
    %246 = vmatprep.subr.mxu0 0.0
    %247 = vmatpush1.msra.mxu0 %v44
    %248 = vmatprep.subr.mxu0 0.0
    %249 = vmatpush1.msra.mxu0 %v43
    %250 = vmatprep.subr.mxu0 0.0
    %251 = vmatpush2.msra.mxu0 0.0
    %252 = vmatprep.subr.mxu0 0.0
    %253 = vmatpush2.msra.mxu0 0.0
    %254 = vmatprep.subr.mxu0 0.0
    %255 = vmatpush2.msra.mxu0 0.0
    %256 = vmatprep.subr.mxu0 0.0
    %257 = vmatpush2.msra.mxu0 0.0
    %258 = vmatprep.subr.mxu0 0.0
    %259 = vmatpush2.msra.mxu0 0.0
    %260 = vmatprep.subr.mxu0 0.0
    %261 = vmatpush2.msra.mxu0 0.0
    %262 = vmatprep.subr.mxu0 0.0
    %263 = vmatpush2.msra.mxu0 0.0
    %264 = vmatprep.subr.mxu0 0.0
    %265 = vmatpush2.msra.mxu0 0.0
    %266 = vmatprep.subr.mxu0 0.0
    %267 = vmatpush2.msra.mxu0 0.0
    %268 = vmatprep.subr.mxu0 0.0
    %269 = vmatpush2.msra.mxu0 0.0
    %270 = vmatprep.subr.mxu0 0.0
    %271 = vmatpush2.msra.mxu0 0.0
    %272 = vmatprep.subr.mxu0 0.0
    %273 = vmatpush2.msra.mxu0 0.0
    %274 = vmatprep.subr.mxu0 0.0
    %275 = vmatpush2.msra.mxu0 0.0
    %276 = vmatprep.subr.mxu0 0.0
    %277 = vmatpush2.msra.mxu0 0.0
    %278 = vmatprep.subr.mxu0 0.0
    %279 = vmatpush2.msra.mxu0 0.0
    %280 = vmatprep.subr.mxu0 0.0
    %281 = vmatpush2.msra.mxu0 0.0
    %282 = vmatprep.mubr.f32.mxu0 0.0
    %283 = vmatmul.mubr.f32.gmra.mxu0 %v35
    %v284 = vpop.f32.mrf.mxu0
    %v285 = vadd.f32 %v127, %v284
    %v286 = vpop.f32.mrf.mxu0
    %287 = vmatprep.mubr.f32.mxu0 0.0
    %288 = vmatmul.mubr.f32.gmra.mxu0 %v36
    %v289 = vpop.f32.mrf.mxu0
    %v290 = vadd.f32 %v127, %v289
    %v291 = vpop.f32.mrf.mxu0
    %292 = vdwg.mxu0
    %v293 = vmul.f32 %v285, 0.01
    %v294 = vmul.f32 %v290, 0.01
    %v295 = vmax.f32 %v285, %v293
    %v296 = vmax.f32 %v290, %v294
    %v298 = vsel %vm132, %v216, 0
    %v301 = vsel %vm132, %v217, 0
    %303 = vmatprep.subr.mxu0 0.0
    %304 = vmatpush1.msra.mxu0 0.0
    %305 = vmatprep.subr.mxu0 0.0
    %306 = vmatpush1.msra.mxu0 0.0
    %307 = vmatprep.subr.mxu0 0.0
    %308 = vmatpush1.msra.mxu0 0.0
    %309 = vmatprep.subr.mxu0 0.0
    %310 = vmatpush1.msra.mxu0 0.0
    %311 = vmatprep.subr.mxu0 0.0
    %312 = vmatpush1.msra.mxu0 0.0
    %313 = vmatprep.subr.mxu0 0.0
    %314 = vmatpush1.msra.mxu0 0.0
    %315 = vmatprep.subr.mxu0 0.0
    %316 = vmatpush1.msra.mxu0 0.0
    %317 = vmatprep.subr.mxu0 0.0
    %318 = vmatpush1.msra.mxu0 0.0
    %319 = vmatprep.subr.mxu0 0.0
    %320 = vmatpush1.msra.mxu0 0.0
    %321 = vmatprep.subr.mxu0 0.0
    %322 = vmatpush1.msra.mxu0 0.0
    %323 = vmatprep.subr.mxu0 0.0
    %324 = vmatpush1.msra.mxu0 0.0
    %325 = vmatprep.subr.mxu0 0.0
    %326 = vmatpush1.msra.mxu0 0.0
    %327 = vmatprep.subr.mxu0 0.0
    %328 = vmatpush1.msra.mxu0 0.0
    %329 = vmatprep.subr.mxu0 0.0
    %330 = vmatpush1.msra.mxu0 0.0
    %331 = vmatprep.subr.mxu0 0.0
    %332 = vmatpush1.msra.mxu0 %v40
    %333 = vmatprep.subr.mxu0 0.0
    %334 = vmatpush1.msra.mxu0 %v39
    %335 = vmatprep.subr.mxu0 0.0
    %336 = vmatpush2.msra.mxu0 0.0
    %337 = vmatprep.subr.mxu0 0.0
    %338 = vmatpush2.msra.mxu0 0.0
    %339 = vmatprep.subr.mxu0 0.0
    %340 = vmatpush2.msra.mxu0 0.0
    %341 = vmatprep.subr.mxu0 0.0
    %342 = vmatpush2.msra.mxu0 0.0
    %343 = vmatprep.subr.mxu0 0.0
    %344 = vmatpush2.msra.mxu0 0.0
    %345 = vmatprep.subr.mxu0 0.0
    %346 = vmatpush2.msra.mxu0 0.0
    %347 = vmatprep.subr.mxu0 0.0
    %348 = vmatpush2.msra.mxu0 0.0
    %349 = vmatprep.subr.mxu0 0.0
    %350 = vmatpush2.msra.mxu0 0.0
    %351 = vmatprep.subr.mxu0 0.0
    %352 = vmatpush2.msra.mxu0 0.0
    %353 = vmatprep.subr.mxu0 0.0
    %354 = vmatpush2.msra.mxu0 0.0
    %355 = vmatprep.subr.mxu0 0.0
    %356 = vmatpush2.msra.mxu0 0.0
    %357 = vmatprep.subr.mxu0 0.0
    %358 = vmatpush2.msra.mxu0 0.0
    %359 = vmatprep.subr.mxu0 0.0
    %360 = vmatpush2.msra.mxu0 0.0
    %361 = vmatprep.subr.mxu0 0.0
    %362 = vmatpush2.msra.mxu0 0.0
    %363 = vmatprep.subr.mxu0 0.0
    %364 = vmatpush2.msra.mxu0 0.0
    %365 = vmatprep.subr.mxu0 0.0
    %366 = vmatpush2.msra.mxu0 0.0
    %367 = vmatprep.mubr.f32.mxu0 0.0
    %368 = vmatmul.mubr.f32.gmra.mxu0 %v298
    %v369 = vpop.f32.mrf.mxu0
    %v370 = vadd.f32 %v126, %v369
    %v371 = vpop.f32.mrf.mxu0
    %372 = vmatprep.mubr.f32.mxu0 0.0
    %373 = vmatmul.mubr.f32.gmra.mxu0 %v301
    %v374 = vpop.f32.mrf.mxu0
    %v375 = vadd.f32 %v126, %v374
    %v376 = vpop.f32.mrf.mxu0
    %377 = vdwg.mxu0
    %378 = vmatprep.subr.mxu0 0.0
    %379 = vmatpush1.msra.mxu0 %v74
    %380 = vmatprep.subr.mxu0 0.0
    %381 = vmatpush1.msra.mxu0 %v73
    %382 = vmatprep.subr.mxu0 0.0
    %383 = vmatpush1.msra.mxu0 %v72
    %384 = vmatprep.subr.mxu0 0.0
    %385 = vmatpush1.msra.mxu0 %v71
    %386 = vmatprep.subr.mxu0 0.0
    %387 = vmatpush1.msra.mxu0 %v70
    %388 = vmatprep.subr.mxu0 0.0
    %389 = vmatpush1.msra.mxu0 %v69
    %390 = vmatprep.subr.mxu0 0.0
    %391 = vmatpush1.msra.mxu0 %v68
    %392 = vmatprep.subr.mxu0 0.0
    %393 = vmatpush1.msra.mxu0 %v67
    %394 = vmatprep.subr.mxu0 0.0
    %395 = vmatpush1.msra.mxu0 %v66
    %396 = vmatprep.subr.mxu0 0.0
    %397 = vmatpush1.msra.mxu0 %v65
    %398 = vmatprep.subr.mxu0 0.0
    %399 = vmatpush1.msra.mxu0 %v64
    %400 = vmatprep.subr.mxu0 0.0
    %401 = vmatpush1.msra.mxu0 %v63
    %402 = vmatprep.subr.mxu0 0.0
    %403 = vmatpush1.msra.mxu0 %v62
    %404 = vmatprep.subr.mxu0 0.0
    %405 = vmatpush1.msra.mxu0 %v61
    %406 = vmatprep.subr.mxu0 0.0
    %407 = vmatpush1.msra.mxu0 %v60
    %408 = vmatprep.subr.mxu0 0.0
    %409 = vmatpush1.msra.mxu0 %v59
    %410 = vmatprep.subr.mxu0 0.0
    %411 = vmatpush2.msra.mxu0 0.0
    %412 = vmatprep.subr.mxu0 0.0
    %413 = vmatpush2.msra.mxu0 0.0
    %414 = vmatprep.subr.mxu0 0.0
    %415 = vmatpush2.msra.mxu0 0.0
    %416 = vmatprep.subr.mxu0 0.0
    %417 = vmatpush2.msra.mxu0 0.0
    %418 = vmatprep.subr.mxu0 0.0
    %419 = vmatpush2.msra.mxu0 0.0
    %420 = vmatprep.subr.mxu0 0.0
    %421 = vmatpush2.msra.mxu0 0.0
    %422 = vmatprep.subr.mxu0 0.0
    %423 = vmatpush2.msra.mxu0 0.0
    %424 = vmatprep.subr.mxu0 0.0
    %425 = vmatpush2.msra.mxu0 0.0
    %426 = vmatprep.subr.mxu0 0.0
    %427 = vmatpush2.msra.mxu0 0.0
    %428 = vmatprep.subr.mxu0 0.0
    %429 = vmatpush2.msra.mxu0 0.0
    %430 = vmatprep.subr.mxu0 0.0
    %431 = vmatpush2.msra.mxu0 0.0
    %432 = vmatprep.subr.mxu0 0.0
    %433 = vmatpush2.msra.mxu0 0.0
    %434 = vmatprep.subr.mxu0 0.0
    %435 = vmatpush2.msra.mxu0 0.0
    %436 = vmatprep.subr.mxu0 0.0
    %437 = vmatpush2.msra.mxu0 0.0
    %438 = vmatprep.subr.mxu0 0.0
    %439 = vmatpush2.msra.mxu0 0.0
    %440 = vmatprep.subr.mxu0 0.0
    %441 = vmatpush2.msra.mxu0 0.0
    %442 = vmatprep.mubr.f32.mxu0 0.0
    %443 = vmatmul.mubr.f32.gmra.mxu0 %v295
    %v444 = vpop.f32.mrf.mxu0
    %v445 = vadd.f32 0.0, %v444
    %v446 = vpop.f32.mrf.mxu0
    %447 = vmatprep.mubr.f32.mxu0 0.0
    %448 = vmatmul.mubr.f32.gmra.mxu0 %v296
    %v449 = vpop.f32.mrf.mxu0
    %v450 = vadd.f32 0.0, %v449
    %v451 = vpop.f32.mrf.mxu0
    %452 = vdwg.mxu0
    %v453 = vadd.f32 %v370, %v445
    %v454 = vadd.f32 %v375, %v450
    %v455 = vmax.f32 %v453, 0.0
    %v456 = vmax.f32 %v454, 0.0
    %457 = vadd.xlane.f32.xlu0 %v455
    %v458 = vpop.xlane.xlu0 %457
    %459 = vadd.xlane.f32.xlu0 %v456
    %v460 = vpop.xlane.xlu0 %459
    %v461 = vadd.f32 %v458, %v460
    %v462 = vmul.f32 %v461, 0.00390625
    %v463 = vsub.f32 %v455, %v462
    %v464 = vsub.f32 %v456, %v462
    %v465 = vmul.f32 %v463, %v463
    %v466 = vmul.f32 %v464, %v464
    %467 = vadd.xlane.f32.xlu0 %v465
    %v468 = vpop.xlane.xlu0 %467
    %469 = vadd.xlane.f32.xlu0 %v466
    %v470 = vpop.xlane.xlu0 %469
    %v471 = vadd.f32 %v468, %v470
    %v472 = vmul.f32 %v471, 0.00390625
    %v473 = vadd.f32 %v472, 1e-05
    %v474 = vrsqrt.pop %v473
    %v475 = vmul.f32 %v124, %v474
    %477 = vset.pattern.permute.xlu0 0
    %478 = vperm.xlu0 %477, %v475
    %v479 = vpop.permute.xlu0 %478
    %v481 = vmul.f32 %v463, %v479
    %v482 = vmul.f32 %v464, %v479
    %484 = vset.pattern.permute.xlu0 1
    %485 = vperm.xlu0 %484, %v124
    %v486 = vpop.permute.xlu0 %485
    %v488 = vadd.f32 %v481, %v486
    %v489 = vadd.f32 %v482, %v486
    %491 = vset.pattern.permute.xlu0 0
    %492 = vperm.xlu0 %491, %v131
    %v493 = vpop.permute.xlu0 %492
    %495 = vmatprep.subr.mxu0 0.0
    %496 = vmatpush1.msra.mxu0 %v122
    %497 = vmatprep.subr.mxu0 0.0
    %498 = vmatpush1.msra.mxu0 %v121
    %499 = vmatprep.subr.mxu0 0.0
    %500 = vmatpush1.msra.mxu0 %v120
    %501 = vmatprep.subr.mxu0 0.0
    %502 = vmatpush1.msra.mxu0 %v119
    %503 = vmatprep.subr.mxu0 0.0
    %504 = vmatpush1.msra.mxu0 %v118
    %505 = vmatprep.subr.mxu0 0.0
    %506 = vmatpush1.msra.mxu0 %v117
    %507 = vmatprep.subr.mxu0 0.0
    %508 = vmatpush1.msra.mxu0 %v116
    %509 = vmatprep.subr.mxu0 0.0
    %510 = vmatpush1.msra.mxu0 %v115
    %511 = vmatprep.subr.mxu0 0.0
    %512 = vmatpush1.msra.mxu0 %v114
    %513 = vmatprep.subr.mxu0 0.0
    %514 = vmatpush1.msra.mxu0 %v113
    %515 = vmatprep.subr.mxu0 0.0
    %516 = vmatpush1.msra.mxu0 %v112
    %517 = vmatprep.subr.mxu0 0.0
    %518 = vmatpush1.msra.mxu0 %v111
    %519 = vmatprep.subr.mxu0 0.0
    %520 = vmatpush1.msra.mxu0 %v110
    %521 = vmatprep.subr.mxu0 0.0
    %522 = vmatpush1.msra.mxu0 %v109
    %523 = vmatprep.subr.mxu0 0.0
    %524 = vmatpush1.msra.mxu0 %v108
    %525 = vmatprep.subr.mxu0 0.0
    %526 = vmatpush1.msra.mxu0 %v107
    %527 = vmatprep.subr.mxu0 0.0
    %528 = vmatpush2.msra.mxu0 0.0
    %529 = vmatprep.subr.mxu0 0.0
    %530 = vmatpush2.msra.mxu0 0.0
    %531 = vmatprep.subr.mxu0 0.0
    %532 = vmatpush2.msra.mxu0 0.0
    %533 = vmatprep.subr.mxu0 0.0
    %534 = vmatpush2.msra.mxu0 0.0
    %535 = vmatprep.subr.mxu0 0.0
    %536 = vmatpush2.msra.mxu0 0.0
    %537 = vmatprep.subr.mxu0 0.0
    %538 = vmatpush2.msra.mxu0 0.0
    %539 = vmatprep.subr.mxu0 0.0
    %540 = vmatpush2.msra.mxu0 0.0
    %541 = vmatprep.subr.mxu0 0.0
    %542 = vmatpush2.msra.mxu0 0.0
    %543 = vmatprep.subr.mxu0 0.0
    %544 = vmatpush2.msra.mxu0 0.0
    %545 = vmatprep.subr.mxu0 0.0
    %546 = vmatpush2.msra.mxu0 0.0
    %547 = vmatprep.subr.mxu0 0.0
    %548 = vmatpush2.msra.mxu0 0.0
    %549 = vmatprep.subr.mxu0 0.0
    %550 = vmatpush2.msra.mxu0 0.0
    %551 = vmatprep.subr.mxu0 0.0
    %552 = vmatpush2.msra.mxu0 0.0
    %553 = vmatprep.subr.mxu0 0.0
    %554 = vmatpush2.msra.mxu0 0.0
    %555 = vmatprep.subr.mxu0 0.0
    %556 = vmatpush2.msra.mxu0 0.0
    %557 = vmatprep.subr.mxu0 0.0
    %558 = vmatpush2.msra.mxu0 0.0
    %559 = vmatprep.mubr.f32.mxu0 0.0
    %560 = vmatmul.mubr.f32.gmra.mxu0 %v488
    %v561 = vpop.f32.mrf.mxu0
    %v562 = vadd.f32 %v493, %v561
    %v563 = vpop.f32.mrf.mxu0
    %564 = vmatprep.mubr.f32.mxu0 0.0
    %565 = vmatmul.mubr.f32.gmra.mxu0 %v489
    %v566 = vpop.f32.mrf.mxu0
    %v567 = vadd.f32 %v493, %v566
    %v568 = vpop.f32.mrf.mxu0
    %569 = vdwg.mxu0
    %v570 = vsub.f32 1.0, %v33
    %v571 = vsub.f32 1.0, %v34
    %v572 = vrcp.pop %v570
    %v573 = vrcp.pop %v571
    %v574 = vmul.f32 %v33, %v572
    %v575 = vmul.f32 %v34, %v573
    %v576 = vlog2.pop %v574
    %v577 = vmul.f32 %v576, 0.6931472
    %v578 = vlog2.pop %v575
    %v579 = vmul.f32 %v578, 0.6931472
    %v580 = vadd.f32 %v562, %v577
    %v581 = vadd.f32 %v567, %v579
    %v582 = vmul.f32 %v580, 5.0
    %v583 = vmul.f32 %v581, 5.0
    %v584 = vxor.u32 %v582, 2147483648
    %v585 = vxor.u32 %v583, 2147483648
    %v586 = vmul.f32 %v584, 1.442695
    %v587 = vpow.pop %v586
    %v588 = vmul.f32 %v585, 1.442695
    %v589 = vpow.pop %v588
    %v590 = vadd.f32 %v587, 1.0
    %v591 = vadd.f32 %v589, 1.0
    %v592 = vrcp.pop %v590
    %v593 = vmul.f32 1.0, %v592
    %v594 = vrcp.pop %v591
    %v595 = vmul.f32 1.0, %v594
    %vm596 = vcmask 64512
    %v598 = vsel %vm596, %v593, 0
    %v601 = vsel %vm596, %v595, 0
    %603 = vmatprep.subr.mxu0 0.0
    %604 = vmatpush1.msra.mxu0 0.0
    %605 = vmatprep.subr.mxu0 0.0
    %606 = vmatpush1.msra.mxu0 0.0
    %607 = vmatprep.subr.mxu0 0.0
    %608 = vmatpush1.msra.mxu0 0.0
    %609 = vmatprep.subr.mxu0 0.0
    %610 = vmatpush1.msra.mxu0 0.0
    %611 = vmatprep.subr.mxu0 0.0
    %612 = vmatpush1.msra.mxu0 0.0
    %613 = vmatprep.subr.mxu0 0.0
    %614 = vmatpush1.msra.mxu0 0.0
    %615 = vmatprep.subr.mxu0 0.0
    %616 = vmatpush1.msra.mxu0 0.0
    %617 = vmatprep.subr.mxu0 0.0
    %618 = vmatpush1.msra.mxu0 0.0
    %619 = vmatprep.subr.mxu0 0.0
    %620 = vmatpush1.msra.mxu0 0.0
    %621 = vmatprep.subr.mxu0 0.0
    %622 = vmatpush1.msra.mxu0 0.0
    %623 = vmatprep.subr.mxu0 0.0
    %624 = vmatpush1.msra.mxu0 0.0
    %625 = vmatprep.subr.mxu0 0.0
    %626 = vmatpush1.msra.mxu0 0.0
    %627 = vmatprep.subr.mxu0 0.0
    %628 = vmatpush1.msra.mxu0 0.0
    %629 = vmatprep.subr.mxu0 0.0
    %630 = vmatpush1.msra.mxu0 0.0
    %631 = vmatprep.subr.mxu0 0.0
    %632 = vmatpush1.msra.mxu0 0.0
    %633 = vmatprep.subr.mxu0 0.0
    %634 = vmatpush1.msra.mxu0 %v123
    %635 = vmatprep.subr.mxu0 0.0
    %636 = vmatpush2.msra.mxu0 0.0
    %637 = vmatprep.subr.mxu0 0.0
    %638 = vmatpush2.msra.mxu0 0.0
    %639 = vmatprep.subr.mxu0 0.0
    %640 = vmatpush2.msra.mxu0 0.0
    %641 = vmatprep.subr.mxu0 0.0
    %642 = vmatpush2.msra.mxu0 0.0
    %643 = vmatprep.subr.mxu0 0.0
    %644 = vmatpush2.msra.mxu0 0.0
    %645 = vmatprep.subr.mxu0 0.0
    %646 = vmatpush2.msra.mxu0 0.0
    %647 = vmatprep.subr.mxu0 0.0
    %648 = vmatpush2.msra.mxu0 0.0
    %649 = vmatprep.subr.mxu0 0.0
    %650 = vmatpush2.msra.mxu0 0.0
    %651 = vmatprep.subr.mxu0 0.0
    %652 = vmatpush2.msra.mxu0 0.0
    %653 = vmatprep.subr.mxu0 0.0
    %654 = vmatpush2.msra.mxu0 0.0
    %655 = vmatprep.subr.mxu0 0.0
    %656 = vmatpush2.msra.mxu0 0.0
    %657 = vmatprep.subr.mxu0 0.0
    %658 = vmatpush2.msra.mxu0 0.0
    %659 = vmatprep.subr.mxu0 0.0
    %660 = vmatpush2.msra.mxu0 0.0
    %661 = vmatprep.subr.mxu0 0.0
    %662 = vmatpush2.msra.mxu0 0.0
    %663 = vmatprep.subr.mxu0 0.0
    %664 = vmatpush2.msra.mxu0 0.0
    %665 = vmatprep.subr.mxu0 0.0
    %666 = vmatpush2.msra.mxu0 0.0
    %667 = vmatprep.mubr.f32.mxu0 0.0
    %668 = vmatmul.mubr.f32.gmra.mxu0 %v598
    %v669 = vpop.f32.mrf.mxu0
    %v670 = vadd.f32 %v128, %v669
    %v671 = vpop.f32.mrf.mxu0
    %672 = vmatprep.mubr.f32.mxu0 0.0
    %673 = vmatmul.mubr.f32.gmra.mxu0 %v601
    %v674 = vpop.f32.mrf.mxu0
    %v675 = vadd.f32 %v128, %v674
    %v676 = vpop.f32.mrf.mxu0
    %677 = vdwg.mxu0
    %v678 = vmul.f32 %v670, 0.01
    %v679 = vmul.f32 %v675, 0.01
    %v680 = vmax.f32 %v670, %v678
    %v681 = vmax.f32 %v675, %v679
    %v683 = vlaneseq
    %v684 = vshrl.u32 %v683, 7
    %v685 = vsub.s32 0, %v684
    %v686 = vrot.slane %v130, %v685
    %v687 = vlaneseq
    %v688 = vshrl.u32 %v687, 7
    %v689 = vsub.s32 1, %v688
    %v690 = vrot.slane %v130, %v689
    %693 = vmatprep.subr.mxu0 %v106
    %694 = vmatpush1.msra.mxu0 %v105
    %695 = vmatprep.subr.mxu0 %v104
    %696 = vmatpush1.msra.mxu0 %v103
    %697 = vmatprep.subr.mxu0 %v102
    %698 = vmatpush1.msra.mxu0 %v101
    %699 = vmatprep.subr.mxu0 %v100
    %700 = vmatpush1.msra.mxu0 %v99
    %701 = vmatprep.subr.mxu0 %v98
    %702 = vmatpush1.msra.mxu0 %v97
    %703 = vmatprep.subr.mxu0 %v96
    %704 = vmatpush1.msra.mxu0 %v95
    %705 = vmatprep.subr.mxu0 %v94
    %706 = vmatpush1.msra.mxu0 %v93
    %707 = vmatprep.subr.mxu0 %v92
    %708 = vmatpush1.msra.mxu0 %v91
    %709 = vmatprep.subr.mxu0 %v90
    %710 = vmatpush1.msra.mxu0 %v89
    %711 = vmatprep.subr.mxu0 %v88
    %712 = vmatpush1.msra.mxu0 %v87
    %713 = vmatprep.subr.mxu0 %v86
    %714 = vmatpush1.msra.mxu0 %v85
    %715 = vmatprep.subr.mxu0 %v84
    %716 = vmatpush1.msra.mxu0 %v83
    %717 = vmatprep.subr.mxu0 %v82
    %718 = vmatpush1.msra.mxu0 %v81
    %719 = vmatprep.subr.mxu0 %v80
    %720 = vmatpush1.msra.mxu0 %v79
    %721 = vmatprep.subr.mxu0 %v78
    %722 = vmatpush1.msra.mxu0 %v77
    %723 = vmatprep.subr.mxu0 %v76
    %724 = vmatpush1.msra.mxu0 %v75
    %725 = vmatprep.subr.mxu0 0.0
    %726 = vmatpush2.msra.mxu0 0.0
    %727 = vmatprep.subr.mxu0 0.0
    %728 = vmatpush2.msra.mxu0 0.0
    %729 = vmatprep.subr.mxu0 0.0
    %730 = vmatpush2.msra.mxu0 0.0
    %731 = vmatprep.subr.mxu0 0.0
    %732 = vmatpush2.msra.mxu0 0.0
    %733 = vmatprep.subr.mxu0 0.0
    %734 = vmatpush2.msra.mxu0 0.0
    %735 = vmatprep.subr.mxu0 0.0
    %736 = vmatpush2.msra.mxu0 0.0
    %737 = vmatprep.subr.mxu0 0.0
    %738 = vmatpush2.msra.mxu0 0.0
    %739 = vmatprep.subr.mxu0 0.0
    %740 = vmatpush2.msra.mxu0 0.0
    %741 = vmatprep.subr.mxu0 0.0
    %742 = vmatpush2.msra.mxu0 0.0
    %743 = vmatprep.subr.mxu0 0.0
    %744 = vmatpush2.msra.mxu0 0.0
    %745 = vmatprep.subr.mxu0 0.0
    %746 = vmatpush2.msra.mxu0 0.0
    %747 = vmatprep.subr.mxu0 0.0
    %748 = vmatpush2.msra.mxu0 0.0
    %749 = vmatprep.subr.mxu0 0.0
    %750 = vmatpush2.msra.mxu0 0.0
    %751 = vmatprep.subr.mxu0 0.0
    %752 = vmatpush2.msra.mxu0 0.0
    %753 = vmatprep.subr.mxu0 0.0
    %754 = vmatpush2.msra.mxu0 0.0
    %755 = vmatprep.subr.mxu0 0.0
    %756 = vmatpush2.msra.mxu0 0.0
    %757 = vmatprep.mubr.f32.mxu0 0.0
    %758 = vmatmul.mubr.f32.gmra.mxu0 %v680
    %v759 = vpop.f32.mrf.mxu0
    %v760 = vadd.f32 %v686, %v759
    %v761 = vpop.f32.mrf.mxu0
    %v762 = vadd.f32 %v690, %v761
    %763 = vmatprep.mubr.f32.mxu0 0.0
    %764 = vmatmul.mubr.f32.gmra.mxu0 %v681
    %v765 = vpop.f32.mrf.mxu0
    %v766 = vadd.f32 %v686, %v765
    %v767 = vpop.f32.mrf.mxu0
    %v768 = vadd.f32 %v690, %v767
    %769 = vdwg.mxu0
    %770 = vmatprep.subr.mxu0 0.0
    %771 = vmatpush1.msra.mxu0 0.0
    %772 = vmatprep.subr.mxu0 0.0
    %773 = vmatpush1.msra.mxu0 0.0
    %774 = vmatprep.subr.mxu0 0.0
    %775 = vmatpush1.msra.mxu0 0.0
    %776 = vmatprep.subr.mxu0 0.0
    %777 = vmatpush1.msra.mxu0 0.0
    %778 = vmatprep.subr.mxu0 0.0
    %779 = vmatpush1.msra.mxu0 0.0
    %780 = vmatprep.subr.mxu0 0.0
    %781 = vmatpush1.msra.mxu0 0.0
    %782 = vmatprep.subr.mxu0 0.0
    %783 = vmatpush1.msra.mxu0 0.0
    %784 = vmatprep.subr.mxu0 0.0
    %785 = vmatpush1.msra.mxu0 0.0
    %786 = vmatprep.subr.mxu0 0.0
    %787 = vmatpush1.msra.mxu0 0.0
    %788 = vmatprep.subr.mxu0 0.0
    %789 = vmatpush1.msra.mxu0 0.0
    %790 = vmatprep.subr.mxu0 0.0
    %791 = vmatpush1.msra.mxu0 0.0
    %792 = vmatprep.subr.mxu0 0.0
    %793 = vmatpush1.msra.mxu0 0.0
    %794 = vmatprep.subr.mxu0 0.0
    %795 = vmatpush1.msra.mxu0 0.0
    %796 = vmatprep.subr.mxu0 0.0
    %797 = vmatpush1.msra.mxu0 0.0
    %798 = vmatprep.subr.mxu0 0.0
    %799 = vmatpush1.msra.mxu0 %v42
    %800 = vmatprep.subr.mxu0 0.0
    %801 = vmatpush1.msra.mxu0 %v41
    %802 = vmatprep.subr.mxu0 0.0
    %803 = vmatpush2.msra.mxu0 0.0
    %804 = vmatprep.subr.mxu0 0.0
    %805 = vmatpush2.msra.mxu0 0.0
    %806 = vmatprep.subr.mxu0 0.0
    %807 = vmatpush2.msra.mxu0 0.0
    %808 = vmatprep.subr.mxu0 0.0
    %809 = vmatpush2.msra.mxu0 0.0
    %810 = vmatprep.subr.mxu0 0.0
    %811 = vmatpush2.msra.mxu0 0.0
    %812 = vmatprep.subr.mxu0 0.0
    %813 = vmatpush2.msra.mxu0 0.0
    %814 = vmatprep.subr.mxu0 0.0
    %815 = vmatpush2.msra.mxu0 0.0
    %816 = vmatprep.subr.mxu0 0.0
    %817 = vmatpush2.msra.mxu0 0.0
    %818 = vmatprep.subr.mxu0 0.0
    %819 = vmatpush2.msra.mxu0 0.0
    %820 = vmatprep.subr.mxu0 0.0
    %821 = vmatpush2.msra.mxu0 0.0
    %822 = vmatprep.subr.mxu0 0.0
    %823 = vmatpush2.msra.mxu0 0.0
    %824 = vmatprep.subr.mxu0 0.0
    %825 = vmatpush2.msra.mxu0 0.0
    %826 = vmatprep.subr.mxu0 0.0
    %827 = vmatpush2.msra.mxu0 0.0
    %828 = vmatprep.subr.mxu0 0.0
    %829 = vmatpush2.msra.mxu0 0.0
    %830 = vmatprep.subr.mxu0 0.0
    %831 = vmatpush2.msra.mxu0 0.0
    %832 = vmatprep.subr.mxu0 0.0
    %833 = vmatpush2.msra.mxu0 0.0
    %834 = vmatprep.mubr.f32.mxu0 0.0
    %835 = vmatmul.mubr.f32.gmra.mxu0 %v298
    %v836 = vpop.f32.mrf.mxu0
    %v837 = vadd.f32 0.0, %v836
    %v838 = vpop.f32.mrf.mxu0
    %839 = vmatprep.mubr.f32.mxu0 0.0
    %840 = vmatmul.mubr.f32.gmra.mxu0 %v301
    %v841 = vpop.f32.mrf.mxu0
    %v842 = vadd.f32 0.0, %v841
    %v843 = vpop.f32.mrf.mxu0
    %844 = vdwg.mxu0
    %v845 = vsub.f32 %v760, %v837
    %v846 = vsub.f32 %v766, %v842
    %v847 = vsub.f32 %v762, %v295
    %v848 = vsub.f32 %v768, %v296
    %v849 = vmul.f32 %v845, %v845
    %v850 = vmul.f32 %v846, %v846
    %v851 = vmul.f32 %v847, %v847
    %v852 = vmul.f32 %v848, %v848
    %v853 = vadd.f32 %v849, %v851
    %v854 = vadd.f32 %v850, %v852
    %v855 = vadd.f32 %v853, %v854
    %856 = vadd.xlane.f32.xlu0 %v855
    %v857 = vpop.xlane.xlu0 %856
    %v858 = vrot.slane %v857, 4
    %v859 = vadd.f32 %v857, %v858
    %v860 = vrot.slane %v859, 2
    %v861 = vadd.f32 %v859, %v860
    %v862 = vrot.slane %v861, 1
    %v863 = vadd.f32 %v861, %v862
    %s864 = vtos %v863
    %s865 = smul.f32 %s864, 0.00024414063
    %v866 = vsel %vm596, %v593, 0.0
    %v867 = vsel %vm596, %v595, 0.0
    %v868 = vadd.f32 %v866, %v867
    %v869 = vmul.f32 %v868, 0.5
    %v870 = vsel %vm596, %v869, 0.0
    %v871 = vlaneseq
    %v872 = vshrl.u32 %v871, 7
    %v873 = vlaneseq
    %v874 = vand.u32 %v873, 127
    %vm875 = vcmp.eq.s32.totalorder %v872, 0
    %vm876 = vcmp.eq.s32.totalorder %v874, 64
    %vm877 = vmand %vm875, %vm876
    %v878 = vstv %s865
    %v879 = vsel %vm877, %v878, 0.0
    %v880 = vadd.f32 %v870, %v879
    %881 = vst [vmem:[%s4] sm:$0xff] %v880
    // Predicated region
    $region22: #{glbern_vae_forward.1} parent=1 // pred_check
      _
    $region23: #{glbern_vae_forward.1} parent=1 // pred_check_branch
      %883 = sbr.rel (0) target = $region25
    $region24: #{glbern_vae_forward.1} parent=1 // pred_region
      _
    $region25: #{glbern_vae_forward.1} parent=1 // pred_fallthru
      _
    // Predicated region
    $region26: #{glbern_vae_forward.1} parent=1 // pred_check
      _
    $region27: #{glbern_vae_forward.1} parent=1 // pred_check_branch
      %885 = sbr.rel (0) target = $region29
    $region28: #{glbern_vae_forward.1} parent=1 // pred_region
      _
    $region29: #{glbern_vae_forward.1} parent=1 // pred_fallthru
      _
    %886 = vsyncpa [#allocation3], 1

</llo_original>
